<compile_context>
chip_gen: v5e
topology: v5e:2x2
jax: 0.10.0
libtpu: 0.0.40
codegen_flags: <defaults>
</compile_context>

<pallas_src>
from functools import partial

import jax
import jax.numpy as jnp
from jax import lax
from jax.experimental import pallas as pl
from jax.experimental.pallas import tpu as pltpu


def _shifted_tokens(x, m, shifts):
    """Apply the per-segment sequence shift to a (S, D) tile.

    x: (S, D) f32 tile.  m: (S, 1) f32 mask (1 = keep) or None; applied only
    inside segments whose shift is nonzero (matches the PyTorch shift()).
    """
    seq_len, dim = x.shape
    n_seg = len(shifts)
    fps = dim // n_seg

    if all(a == 0 for a in shifts):
        return x

    row = lax.broadcasted_iota(jnp.int32, (seq_len, dim), 0)
    col = lax.broadcasted_iota(jnp.int32, (seq_len, dim), 1)

    xm = x if m is None else x * m        # single mask multiply for all segments
    out = x                               # shift==0 segments + "rest" pass through
    for i, amount in enumerate(shifts):
        if amount == 0:
            continue
        # Rotate along the sequence (sublane) axis on the XLU, then zero the
        # wrapped rows so it matches F.pad(t, (0, 0, a, -a), value=0).
        rolled = pltpu.roll(xm, shift=amount % seq_len, axis=0)
        if amount > 0:
            valid = row >= amount
        else:
            valid = row < (seq_len + amount)
        shifted = jnp.where(valid, rolled, 0.0)
        in_segment = (col >= i * fps) & (col < (i + 1) * fps)
        out = jnp.where(in_segment, shifted, out)
    return out


def _matmul_store(x_shifted, w_ref, b_ref, o_ref):
    y = jnp.dot(x_shifted.astype(w_ref.dtype), w_ref[...],
                preferred_element_type=jnp.float32)
    y = y + b_ref[...]
    o_ref[0] = y.astype(o_ref.dtype)


def preshift_kernel_masked(x_ref, mask_ref, w_ref, b_ref, o_ref, *, shifts):
    # x_ref: (1, S, D); mask_ref: (1, S, 1); w_ref: (D, tn) bf16; b_ref: (1, tn)
    _matmul_store(_shifted_tokens(x_ref[0], mask_ref[0], shifts),
                  w_ref, b_ref, o_ref)


def preshift_kernel_nomask(x_ref, w_ref, b_ref, o_ref, *, shifts):
    _matmul_store(_shifted_tokens(x_ref[0], None, shifts), w_ref, b_ref, o_ref)


def _pick_n_tile(d):
    """Largest 128-multiple tile (<=512) that divides D; else the full D."""
    for cand in (512, 256, 128):
        if d > cand and d % cand == 0:
            return cand
    return d


def pre_shift_tokens(x, w_t, b, mask=None, *, shifts, n_tile=None):
    """Fused PreShiftTokens + Linear forward.

    x: (B, S, D) f32; w_t: (D, D) = W^T (in_dim, out_dim); b: (1, D);
    mask: (B, S) bool or None.
    """
    B, S, D = x.shape
    shifts = tuple(shifts)
    tn = n_tile if n_tile is not None else _pick_n_tile(D)
    assert D % tn == 0
    num_n = D // tn

    w_bf16 = w_t.astype(jnp.bfloat16)           # half DMA bytes, ~2x MXU rate
    b_f32 = b.reshape(1, D).astype(jnp.float32)

    x_spec = pl.BlockSpec((1, S, D), lambda bi, ni: (bi, 0, 0))
    w_spec = pl.BlockSpec((D, tn), lambda bi, ni: (0, ni))
    b_spec = pl.BlockSpec((1, tn), lambda bi, ni: (0, ni))
    o_spec = pl.BlockSpec((1, S, tn), lambda bi, ni: (bi, 0, ni))

    if mask is not None:
        mask_f = mask.astype(x.dtype).reshape(B, S, 1)
        kernel = partial(preshift_kernel_masked, shifts=shifts)
        in_specs = [x_spec,
                    pl.BlockSpec((1, S, 1), lambda bi, ni: (bi, 0, 0)),
                    w_spec, b_spec]
        args = (x, mask_f, w_bf16, b_f32)
        mask_bytes = mask_f.size * mask_f.dtype.itemsize
    else:
        kernel = partial(preshift_kernel_nomask, shifts=shifts)
        in_specs = [x_spec, w_spec, b_spec]
        args = (x, w_bf16, b_f32)
        mask_bytes = 0

    bytes_accessed = (x.size * x.dtype.itemsize + mask_bytes
                      + w_bf16.size * w_bf16.dtype.itemsize
                      + b_f32.size * 4
                      + B * S * D * x.dtype.itemsize)
    cost = pl.CostEstimate(flops=2 * B * S * D * D, transcendentals=0,
                           bytes_accessed=bytes_accessed)

    return pl.pallas_call(
        kernel,
        out_shape=jax.ShapeDtypeStruct((B, S, D), x.dtype),
        grid=(B, num_n),
        in_specs=in_specs,
        out_specs=o_spec,
        compiler_params=pltpu.CompilerParams(
            dimension_semantics=("parallel", "parallel"),
            vmem_limit_bytes=32 * 1024 * 1024),
        cost_estimate=cost,
    )(*args)


def reference_forward(x, w_t, b, mask, shifts, matmul_dtype=jnp.float32):
    """Pure-JAX mirror of the PyTorch module. Shift is done in f32; the matmul
    operands can be cast to `matmul_dtype` (f32 accumulation) so the bf16
    kernel can be checked tightly as well as against the pure-f32 semantics."""
    B, S, D = x.shape
    segments = len(shifts)
    fps = D // segments
    pieces = []
    for i, a in enumerate(shifts):
        seg = x[..., i * fps:(i + 1) * fps]
        if a != 0:
            if mask is not None:
                seg = jnp.where(mask[..., None], seg, 0.0)
            if a > 0:
                seg = jnp.pad(seg, ((0, 0), (a, 0), (0, 0)))[:, :S, :]
            else:
                seg = jnp.pad(seg, ((0, 0), (0, -a), (0, 0)))[:, -a:, :]
        pieces.append(seg)
    rest = x[..., segments * fps:]
    if rest.shape[-1] > 0:
        pieces.append(rest)
    x_shifted = jnp.concatenate(pieces, axis=-1)
    y = jnp.dot(x_shifted.astype(matmul_dtype), w_t.astype(matmul_dtype),
                preferred_element_type=jnp.float32)
    return y + b


if __name__ == "__main__":
    key = jax.random.PRNGKey(0)
    k_x, k_w, k_b, k_m = jax.random.split(key, 4)

    # Small, lane/sublane-aligned shapes: S multiple of 8, D multiple of 128,
    # feats_per_shift = 128 -> lane-aligned segments, lane-dense output tile.
    B, S, D = 2, 128, 256
    shifts = (0, 1)

    x = jax.random.normal(k_x, (B, S, D), dtype=jnp.float32)
    w = jax.random.normal(k_w, (D, D), dtype=jnp.float32) * 0.05   # fn = Linear(D, D)
    w_t = w.T
    bias = jax.random.normal(k_b, (1, D), dtype=jnp.float32) * 0.01
    mask = jax.random.bernoulli(k_m, p=0.8, shape=(B, S))

    out = jax.block_until_ready(pre_shift_tokens(x, w_t, bias, mask, shifts=shifts))

    # Tight check vs. a reference that matches the kernel's bf16 matmul numerics.
    ref_bf16 = reference_forward(x, w_t, bias, mask, shifts, matmul_dtype=jnp.bfloat16)
    assert jnp.allclose(out, ref_bf16, atol=1e-3, rtol=1e-3), "mismatch vs bf16 reference"
    # Looser check vs. the pure-f32 module semantics (bf16 rounding only).
    ref_f32 = reference_forward(x, w_t, bias, mask, shifts, matmul_dtype=jnp.float32)
    assert jnp.allclose(out, ref_f32, atol=5e-2, rtol=5e-2), "mismatch vs f32 reference"

    # mask=None path (separately specialized kernel; no ones tensor streamed).
    out_nm = jax.block_until_ready(pre_shift_tokens(x, w_t, bias, None, shifts=shifts))
    ref_nm = reference_forward(x, w_t, bias, None, shifts, matmul_dtype=jnp.bfloat16)
    assert jnp.allclose(out_nm, ref_nm, atol=1e-3, rtol=1e-3), "mismatch (no mask)"

    # Negative shift + leftover "rest" features (D not divisible by #segments).
    shifts2 = (-1, 0, 2)
    out2 = jax.block_until_ready(pre_shift_tokens(x, w_t, bias, mask, shifts=shifts2))
    ref2 = reference_forward(x, w_t, bias, mask, shifts2, matmul_dtype=jnp.bfloat16)
    assert jnp.allclose(out2, ref2, atol=1e-3, rtol=1e-3), "mismatch (neg shift / rest)"

    print("KERNEL_OK")
</pallas_src>

<mosaic_0001>
module attributes {stable_mosaic.version = 11 : i64} {
  func.func @preshift_kernel_masked(%arg0: i32, %arg1: i32, %arg2: memref<1x128x256xf32, #tpu.memory_space<vmem>>, %arg3: memref<1x128x1xf32, #tpu.memory_space<vmem>>, %arg4: memref<256x128xbf16, #tpu.memory_space<vmem>>, %arg5: memref<1x128xf32, #tpu.memory_space<vmem>>, %arg6: memref<1x128x128xf32, #tpu.memory_space<vmem>>) attributes {dimension_semantics = [#tpu.dimension_semantics<parallel>, #tpu.dimension_semantics<parallel>], iteration_bounds = array<i64: 2, 2>, scalar_prefetch = 0 : i64, scratch_operands = 0 : i64, tpu.core_type = #tpu.core_type<tc>, window_params = [{transform_indices = @transform_0, window_bounds = array<i64: 1, 128, 256>}, {transform_indices = @transform_1, window_bounds = array<i64: 1, 128, 1>}, {transform_indices = @transform_2, window_bounds = array<i64: 256, 128>}, {transform_indices = @transform_3, window_bounds = array<i64: 1, 128>}, {transform_indices = @transform_4, window_bounds = array<i64: 1, 128, 128>}]} {
    %c0 = arith.constant 0 : index
    %c0_0 = arith.constant 0 : index
    %c0_1 = arith.constant 0 : index
    %0 = vector.load %arg2[%c0, %c0_0, %c0_1] : memref<1x128x256xf32, #tpu.memory_space<vmem>>, vector<1x128x256xf32>
    %1 = vector.shape_cast %0 : vector<1x128x256xf32> to vector<128x256xf32>
    %c0_2 = arith.constant 0 : index
    %c0_3 = arith.constant 0 : index
    %c0_4 = arith.constant 0 : index
    %2 = vector.load %arg3[%c0_2, %c0_3, %c0_4] : memref<1x128x1xf32, #tpu.memory_space<vmem>>, vector<1x128x1xf32>
    %3 = vector.shape_cast %2 : vector<1x128x1xf32> to vector<128x1xf32>
    %4 = tpu.iota {dimensions = array<i32: 0>} : vector<128x256xi32>
    %5 = tpu.iota {dimensions = array<i32: 1>} : vector<128x256xi32>
    %6 = vector.broadcast %3 : vector<128x1xf32> to vector<128x256xf32>
    %7 = arith.mulf %1, %6 : vector<128x256xf32>
    %c1_i32 = arith.constant 1 : i32
    %8 = tpu.dynamic_rotate %7 by %c1_i32 dim 0 : vector<128x256xf32>, i32 -> vector<128x256xf32>
    %c1_i32_5 = arith.constant 1 : i32
    %9 = vector.broadcast %c1_i32_5 : i32 to vector<128x256xi32>
    %10 = arith.cmpi sge, %4, %9 : vector<128x256xi32>
    %cst = arith.constant 0.000000e+00 : f32
    %11 = vector.broadcast %cst : f32 to vector<128x256xf32>
    %12 = arith.select %10, %8, %11 : vector<128x256xi1>, vector<128x256xf32>
    %c128_i32 = arith.constant 128 : i32
    %13 = vector.broadcast %c128_i32 : i32 to vector<128x256xi32>
    %14 = arith.cmpi sge, %5, %13 : vector<128x256xi32>
    %c256_i32 = arith.constant 256 : i32
    %15 = vector.broadcast %c256_i32 : i32 to vector<128x256xi32>
    %16 = arith.cmpi slt, %5, %15 : vector<128x256xi32>
    %17 = arith.andi %14, %16 : vector<128x256xi1>
    %18 = arith.select %17, %12, %1 : vector<128x256xi1>, vector<128x256xf32>
    %19 = arith.truncf %18 : vector<128x256xf32> to vector<128x256xbf16>
    %c0_6 = arith.constant 0 : index
    %c0_7 = arith.constant 0 : index
    %20 = vector.load %arg4[%c0_6, %c0_7] : memref<256x128xbf16, #tpu.memory_space<vmem>>, vector<256x128xbf16>
    %cst_8 = arith.constant dense<0.000000e+00> : vector<128x128xf32>
    %21 = tpu.matmul %19, %20, %cst_8 {dimension_numbers = #tpu.dot_dimension_numbers<[1], [0], [0], [1], [0, 0, 1, 1], [], []>} : vector<128x256xbf16>, vector<256x128xbf16>, vector<128x128xf32> -> vector<128x128xf32>
    %c0_9 = arith.constant 0 : index
    %c0_10 = arith.constant 0 : index
    %22 = vector.load %arg5[%c0_9, %c0_10] : memref<1x128xf32, #tpu.memory_space<vmem>>, vector<1x128xf32>
    %23 = vector.broadcast %22 : vector<1x128xf32> to vector<128x128xf32>
    %24 = arith.addf %21, %23 : vector<128x128xf32>
    %c0_11 = arith.constant 0 : index
    %c0_12 = arith.constant 0 : index
    %c0_13 = arith.constant 0 : index
    %25 = vector.load %arg6[%c0_11, %c0_12, %c0_13] : memref<1x128x128xf32, #tpu.memory_space<vmem>>, vector<1x128x128xf32>
    %26 = vector.shape_cast %25 : vector<1x128x128xf32> to vector<128x128xf32>
    %27 = vector.shape_cast %24 : vector<128x128xf32> to vector<1x128x128xf32>
    tpu.vector_store %arg6[%c0_11, %c0_12, %c0_13], %27 {strides = array<i32>} : memref<1x128x128xf32, #tpu.memory_space<vmem>>, vector<1x128x128xf32>,
    return
  }
  func.func @transform_0(%arg0: i32, %arg1: i32) -> (i32, i32, i32) {
    %c0_i32 = arith.constant 0 : i32
    %c0_i32_0 = arith.constant 0 : i32
    %c0_i32_1 = arith.constant 0 : i32
    return %arg0, %c0_i32, %c0_i32_0 : i32, i32, i32
  }
  func.func @transform_1(%arg0: i32, %arg1: i32) -> (i32, i32, i32) {
    %c0_i32 = arith.constant 0 : i32
    %c0_i32_0 = arith.constant 0 : i32
    %c0_i32_1 = arith.constant 0 : i32
    return %arg0, %c0_i32, %c0_i32_0 : i32, i32, i32
  }
  func.func @transform_2(%arg0: i32, %arg1: i32) -> (i32, i32) {
    %c0_i32 = arith.constant 0 : i32
    %c0_i32_0 = arith.constant 0 : i32
    return %c0_i32, %arg1 : i32, i32
  }
  func.func @transform_3(%arg0: i32, %arg1: i32) -> (i32, i32) {
    %c0_i32 = arith.constant 0 : i32
    %c0_i32_0 = arith.constant 0 : i32
    return %c0_i32, %arg1 : i32, i32
  }
  func.func @transform_4(%arg0: i32, %arg1: i32) -> (i32, i32, i32) {
    %c0_i32 = arith.constant 0 : i32
    %c0_i32_0 = arith.constant 0 : i32
    return %arg0, %c0_i32, %arg1 : i32, i32, i32
  }
}

</mosaic_0001>

<llo_original>
// kernel: tpu_custom_call.1
$region0: #{tpu_custom_call.1}
  #allocation0 [shape = 'u32[]', space=smem, size = 0x4, offset = 0x4, fixed_abs, tag = 'smem constant byte address 0x4 - core index']
  #allocation1 [shape = 'u32[72,128]{1,0:T(1,128)}', space=vmem, size = 0x9000, scoped, tag = 'internal scratch']
  %s0 = inlined_call_operand.hbm [shape: f32[2,128,256], index: 0, kind: input, shape index: {}]
  %s1 = inlined_call_operand.vmem [shape: f32[2,128,1], index: 1, kind: input, shape index: {}]
  %s2 = inlined_call_operand.vmem [shape: bf16[256,256], index: 2, kind: input, shape index: {}]
  %s3 = inlined_call_operand.vmem [shape: f32[1,256], index: 3, kind: input, shape index: {}]
  %s4 = inlined_call_operand.hbm [shape: f32[2,128,256], index: 4, kind: output, shape index: {}]
  %s5 = sld [smem:[#allocation0]]
  $region94: #{tpu_custom_call.1} parent=0
    _
  %s7 = ssub.s32 1, %s5
  %s8 = scalar_select 0, %s7, %s5
  $region1: #{tpu_custom_call.1} parent=0
    #allocation2 [shape = 'u8[262144]{0}', space=vmem, size = 0x40000, scoped, tag = 'input window, operand 0']
    #allocation3 [shape = 's32[2]{0}', space=sflag, size = 0x8, scoped, tag = 'scoped memory for tpu_custom_call.1']
    #allocation4 [shape = 's32[2]{0}', space=sflag, size = 0x8, scoped, tag = 'scoped memory for tpu_custom_call.1']
    #allocation5 [shape = 'u8[131072]{0}', space=vmem, size = 0x20000, scoped, tag = 'input window, operand 2']
    #allocation6 [shape = 'u8[131072]{0}', space=vmem, size = 0x20000, scoped, tag = 'output window, operand 0']
    %9 = vsyncpa [#allocation3], 0
    %s10 = scalar_lea.sflag [#allocation3], 1
    %11 = vsyncpa %s10, 0
    %12 = vsyncpa [#allocation4], 0
    %s13 = scalar_lea.sflag [#allocation4], 1
    %14 = vsyncpa %s13, 0
    loop: start=0, step=1, limit=6
    $region2: #{tpu_custom_call.1} parent=1 // loop_pre_header
      _
    $region3: #{tpu_custom_call.1} parent=1 // loop_header
      %s16 = sphi 0, %s20
      %p17 = scmp.ge.s32.totalorder %s16, 6
      %s23 = sphi 0, %s35
      %s24 = sphi 0, %s31
      %s25 = sphi 0, %s23
      %s26 = sphi 0, %s24
      %s27 = sphi 0, %s25
      %s28 = sphi 0, %s26
      %s38 = sphi 0, %s40
      %s41 = sphi 0, %s38
      %s42 = sphi 0, %s41
      %s58 = sphi 0, %s42
      %s64 = sphi 0, %s66
      %s67 = sphi 0, %s64
      %s68 = sphi 0, %s67
      %s84 = sphi 0, %s68
      %s90 = sphi 0, %s92
      %s93 = sphi 0, %s90
      %s94 = sphi 0, %s93
      %s110 = sphi 0, %s94
      %s116 = sphi 0, %s118
      %s119 = sphi 0, %s116
      %s120 = sphi 0, %s119
      %s136 = sphi 0, %s120
      %s144 = sphi 0, %s146
      %s147 = sphi 0, %s144
      %s148 = sphi 0, %s147
      %s164 = sphi 0, %s148
    $region4: #{tpu_custom_call.1} parent=1 // loop_header_branch
      %19 = sbr.rel (%p17) target = $region8
    $region5: #{tpu_custom_call.1} parent=1 // loop_body
      %s21 = ssub.s32 %s16, 1
      %s22 = ssub.s32 %s16, 2
      %s29 = sadd.s32 1, %s24
      %p30 = scmp.ge.s32.totalorder %s29, 2
      %s31 = scalar_select %p30, 0, %s29
      %s32 = sadd.s32 1, %s23
      %s33 = scalar_select %p30, %s32, %s23
      %p34 = scmp.ge.s32.totalorder %s33, 2
      %s35 = scalar_select %p34, 0, %s33
      %s36 = ssub.s32 %s23, %s35
      %p37 = scmp.eq.s32.totalorder %s36, 0
      %s39 = sadd.s32 %s38, 1
      %s40 = scalar_select %p37, %s38, %s39
      %p43 = pneg %p37
      %p44 = scmp.eq.s32.totalorder %s16, 3
      %p45 = por %p43, %p44
      %p46 = scmp.ne.s32.totalorder %s38, %s41
      %p47 = scmp.eq.s32.totalorder %s16, 0
      %p48 = por %p46, %p47
      %p49 = scmp.ne.s32.totalorder %s38, %s41
      %p50 = scmp.eq.s32.totalorder %s21, 3
      %p51 = por %p49, %p50
      %p52 = scmp.ne.s32.totalorder %s41, %s42
      %p53 = scmp.eq.s32.totalorder %s21, 0
      %p54 = por %p52, %p53
      %p55 = scmp.ne.s32.totalorder %s41, %s42
      %p56 = scmp.eq.s32.totalorder %s22, 3
      %p57 = por %p55, %p56
      %p59 = scmp.ne.s32.totalorder %s42, %s58
      %p60 = scmp.eq.s32.totalorder %s22, 0
      %p61 = por %p59, %p60
      %s62 = ssub.s32 %s23, %s35
      %p63 = scmp.eq.s32.totalorder %s62, 0
      %s65 = sadd.s32 %s64, 1
      %s66 = scalar_select %p63, %s64, %s65
      %p69 = pneg %p63
      %p70 = scmp.eq.s32.totalorder %s16, 3
      %p71 = por %p69, %p70
      %p72 = scmp.ne.s32.totalorder %s64, %s67
      %p73 = scmp.eq.s32.totalorder %s16, 0
      %p74 = por %p72, %p73
      %p75 = scmp.ne.s32.totalorder %s64, %s67
      %p76 = scmp.eq.s32.totalorder %s21, 3
      %p77 = por %p75, %p76
      %p78 = scmp.ne.s32.totalorder %s67, %s68
      %p79 = scmp.eq.s32.totalorder %s21, 0
      %p80 = por %p78, %p79
      %p81 = scmp.ne.s32.totalorder %s67, %s68
      %p82 = scmp.eq.s32.totalorder %s22, 3
      %p83 = por %p81, %p82
      %p85 = scmp.ne.s32.totalorder %s68, %s84
      %p86 = scmp.eq.s32.totalorder %s22, 0
      %p87 = por %p85, %p86
      %s88 = ssub.s32 %s24, %s31
      %p89 = scmp.eq.s32.totalorder %s88, 0
      %s91 = sadd.s32 %s90, 1
      %s92 = scalar_select %p89, %s90, %s91
      %p95 = pneg %p89
      %p96 = scmp.eq.s32.totalorder %s16, 3
      %p97 = por %p95, %p96
      %p98 = scmp.ne.s32.totalorder %s90, %s93
      %p99 = scmp.eq.s32.totalorder %s16, 0
      %p100 = por %p98, %p99
      %p101 = scmp.ne.s32.totalorder %s90, %s93
      %p102 = scmp.eq.s32.totalorder %s21, 3
      %p103 = por %p101, %p102
      %p104 = scmp.ne.s32.totalorder %s93, %s94
      %p105 = scmp.eq.s32.totalorder %s21, 0
      %p106 = por %p104, %p105
      %p107 = scmp.ne.s32.totalorder %s93, %s94
      %p108 = scmp.eq.s32.totalorder %s22, 3
      %p109 = por %p107, %p108
      %p111 = scmp.ne.s32.totalorder %s94, %s110
      %p112 = scmp.eq.s32.totalorder %s22, 0
      %p113 = por %p111, %p112
      %s114 = ssub.s32 %s24, %s31
      %p115 = scmp.eq.s32.totalorder %s114, 0
      %s117 = sadd.s32 %s116, 1
      %s118 = scalar_select %p115, %s116, %s117
      %p121 = pneg %p115
      %p122 = scmp.eq.s32.totalorder %s16, 3
      %p123 = por %p121, %p122
      %p124 = scmp.ne.s32.totalorder %s116, %s119
      %p125 = scmp.eq.s32.totalorder %s16, 0
      %p126 = por %p124, %p125
      %p127 = scmp.ne.s32.totalorder %s116, %s119
      %p128 = scmp.eq.s32.totalorder %s21, 3
      %p129 = por %p127, %p128
      %p130 = scmp.ne.s32.totalorder %s119, %s120
      %p131 = scmp.eq.s32.totalorder %s21, 0
      %p132 = por %p130, %p131
      %p133 = scmp.ne.s32.totalorder %s119, %s120
      %p134 = scmp.eq.s32.totalorder %s22, 3
      %p135 = por %p133, %p134
      %p137 = scmp.ne.s32.totalorder %s120, %s136
      %p138 = scmp.eq.s32.totalorder %s22, 0
      %p139 = por %p137, %p138
      %s140 = ssub.s32 %s23, %s35
      %s141 = ssub.s32 %s24, %s31
      %s142 = sor.u32 %s140, %s141
      %p143 = scmp.eq.s32.totalorder %s142, 0
      %s145 = sadd.s32 %s144, 1
      %s146 = scalar_select %p143, %s144, %s145
      %p149 = pneg %p143
      %p150 = scmp.eq.s32.totalorder %s16, 3
      %p151 = por %p149, %p150
      %p152 = scmp.ne.s32.totalorder %s144, %s147
      %p153 = scmp.eq.s32.totalorder %s16, 0
      %p154 = por %p152, %p153
      %p155 = scmp.ne.s32.totalorder %s144, %s147
      %p156 = scmp.eq.s32.totalorder %s21, 3
      %p157 = por %p155, %p156
      %p158 = scmp.ne.s32.totalorder %s147, %s148
      %p159 = scmp.eq.s32.totalorder %s21, 0
      %p160 = por %p158, %p159
      %p161 = scmp.ne.s32.totalorder %s147, %s148
      %p162 = scmp.eq.s32.totalorder %s22, 3
      %p163 = por %p161, %p162
      %p165 = scmp.ne.s32.totalorder %s148, %s164
      %p166 = scmp.eq.s32.totalorder %s22, 0
      %p167 = por %p165, %p166
      %p168 = scmp.le.s32.totalorder 1, %s16
      %p169 = scmp.lt.s32.totalorder %s16, 5
      %p170 = pnand %p168, %p169
      %p171 = pneg %p170
      // Predicated region
      $region9: #{tpu_custom_call.1} parent=5 // pred_check
        _
      $region10: #{tpu_custom_call.1} parent=5 // pred_check_branch
        %173 = sbr.rel (%p170) target = $region12
      $region11: #{tpu_custom_call.1} parent=5 // pred_region
        %s174 = ssub.s32 %s16, 1
      $region12: #{tpu_custom_call.1} parent=5 // pred_fallthru
        _
      %p175 = scmp.lt.s32.totalorder %s16, 4
      // Predicated region
      $region13: #{tpu_custom_call.1} parent=5 // pred_check
        %p176 = pneg %p175
      $region14: #{tpu_custom_call.1} parent=5 // pred_check_branch
        %178 = sbr.rel (%p176) target = $region16
      $region15: #{tpu_custom_call.1} parent=5 // pred_region
        // Predicated region
        $region17: #{tpu_custom_call.1} parent=15 // pred_check
          %p179 = pneg %p48
        $region18: #{tpu_custom_call.1} parent=15 // pred_check_branch
          %181 = sbr.rel (%p179) target = $region20
        $region19: #{tpu_custom_call.1} parent=15 // pred_region
          %s182 = sand.u32 %s38, 1
          %s183 = scalar_lea.sflag [#allocation3], %s182
          %s184 = sand.u32 %s38, 1
          %s185 = smul.addr %s184, 256
          %s186 = scalar_lea.vmem [#allocation2], %s185
          %188 = vsyncadd %s183, 0
          %s189 = smul.addr %s23, 32
          %s190 = smul.addr %s189, 8
          %s191 = scalar_lea.hbm %s0, %s190
          %s192 = sshll.u32 %s191, 4
          %s193 = int_to_ptr.hbm [resolvable:$true] %s192
          %s194 = sshll.u32 %s186, 4
          %s195 = int_to_ptr.vmem [resolvable:$true] %s194
          %200 = dma.hbm_to_vmem [thread:$0]  %s193, 4096, %s195, %s183, 256, 256, 16
        $region20: #{tpu_custom_call.1} parent=15 // pred_fallthru
          _
        // Predicated region
        $region21: #{tpu_custom_call.1} parent=15 // pred_check
          %p201 = pneg %p74
        $region22: #{tpu_custom_call.1} parent=15 // pred_check_branch
          %203 = sbr.rel (%p201) target = $region24
        $region23: #{tpu_custom_call.1} parent=15 // pred_region
          %p204 = scmp.lt.s32.totalorder %s23, 1
          %s205 = scalar_select %p204, %s23, 1
          %s206 = smul.addr %s205, 16
          %s207 = smul.addr %s206, 8
          %s208 = scalar_lea.vmem %s1, %s207
        $region24: #{tpu_custom_call.1} parent=15 // pred_fallthru
          _
        // Predicated region
        $region25: #{tpu_custom_call.1} parent=15 // pred_check
          %p209 = pneg %p100
        $region26: #{tpu_custom_call.1} parent=15 // pred_check_branch
          %211 = sbr.rel (%p209) target = $region28
        $region27: #{tpu_custom_call.1} parent=15 // pred_region
          %s212 = sand.u32 %s90, 1
          %s213 = sand.u32 %s90, 1
          %s214 = smul.addr %s213, 128
          %s215 = scalar_lea.vmem [#allocation5], %s214
          %s216 = smul.addr %s24, 4
          %s217 = scalar_lea.vmem %s2, %s216
          // Predicated region
          $region29: #{tpu_custom_call.1} parent=27 // pred_check
            _
          $region30: #{tpu_custom_call.1} parent=27 // pred_check_branch
            %219 = sbr.rel (0) target = $region32
          $region31: #{tpu_custom_call.1} parent=27 // pred_region
            // Predicated region
            $region33: #{tpu_custom_call.1} parent=31 // pred_check
              _
            $region34: #{tpu_custom_call.1} parent=31 // pred_check_branch
              %221 = sbr.rel target = $region36
            $region35: #{tpu_custom_call.1} parent=31 // pred_region
              // Predicated region
              $region48: #{tpu_custom_call.1} parent=35 // pred_check
                _
              $region49: #{tpu_custom_call.1} parent=35 // pred_check_branch
                %299 = sbr.rel (0) target = $region51
              $region50: #{tpu_custom_call.1} parent=35 // pred_region
                loop: start=0, step=1, limit=1
                $region52: #{tpu_custom_call.1} parent=50 // loop_pre_header
                  _
                $region53: #{tpu_custom_call.1} parent=50 // loop_header
                  %s301 = sphi 0, %s305
                  %p302 = scmp.ge.s32.totalorder %s301, 1
                  %s306 = sphi %s217, %s217
                  %s307 = sphi %s215, %s215
                $region54: #{tpu_custom_call.1} parent=50 // loop_header_branch
                  %304 = sbr.rel (%p302) target = $region58
                $region55: #{tpu_custom_call.1} parent=50 // loop_body
                  _
                $region56: #{tpu_custom_call.1} parent=50 // loop_footer
                  %s305 = sadd.s32 1, %s301
                $region57: #{tpu_custom_call.1} parent=50 // loop_footer_branch
                  %300 = sbr.rel target = $region53
                $region58: #{tpu_custom_call.1} parent=50 // loop_exit
                  _
                %s309 = ssub.s32 16, 1
                loop: start=0, step=1, limit=1
                $region59: #{tpu_custom_call.1} parent=50 // loop_pre_header
                  _
                $region60: #{tpu_custom_call.1} parent=50 // loop_header
                  %s311 = sphi 0, %s315
                  %p312 = scmp.ge.s32.totalorder %s311, 1
                  %s316 = sphi %s217, %s217
                  %s317 = sphi %s215, %s215
                $region61: #{tpu_custom_call.1} parent=50 // loop_header_branch
                  %314 = sbr.rel (%p312) target = $region65
                $region62: #{tpu_custom_call.1} parent=50 // loop_body
                  %v318 = vld [vmem:[%s316] sm:%s309]
                  %319 = vst [vmem:[%s317] sm:%s309] %v318
                  %v320 = vld [vmem:[%s316 + $0x8] sm:%s309]
                  %321 = vst [vmem:[%s317 + $0x4] sm:%s309] %v320
                  %v322 = vld [vmem:[%s316 + $0x10] sm:%s309]
                  %323 = vst [vmem:[%s317 + $0x8] sm:%s309] %v322
                  %v324 = vld [vmem:[%s316 + $0x18] sm:%s309]
                  %325 = vst [vmem:[%s317 + $0xc] sm:%s309] %v324
                  %v326 = vld [vmem:[%s316 + $0x20] sm:%s309]
                  %327 = vst [vmem:[%s317 + $0x10] sm:%s309] %v326
                  %v328 = vld [vmem:[%s316 + $0x28] sm:%s309]
                  %329 = vst [vmem:[%s317 + $0x14] sm:%s309] %v328
                  %v330 = vld [vmem:[%s316 + $0x30] sm:%s309]
                  %331 = vst [vmem:[%s317 + $0x18] sm:%s309] %v330
                  %v332 = vld [vmem:[%s316 + $0x38] sm:%s309]
                  %333 = vst [vmem:[%s317 + $0x1c] sm:%s309] %v332
                  %v334 = vld [vmem:[%s316 + $0x40] sm:%s309]
                  %335 = vst [vmem:[%s317 + $0x20] sm:%s309] %v334
                  %v336 = vld [vmem:[%s316 + $0x48] sm:%s309]
                  %337 = vst [vmem:[%s317 + $0x24] sm:%s309] %v336
                  %v338 = vld [vmem:[%s316 + $0x50] sm:%s309]
                  %339 = vst [vmem:[%s317 + $0x28] sm:%s309] %v338
                  %v340 = vld [vmem:[%s316 + $0x58] sm:%s309]
                  %341 = vst [vmem:[%s317 + $0x2c] sm:%s309] %v340
                  %v342 = vld [vmem:[%s316 + $0x60] sm:%s309]
                  %343 = vst [vmem:[%s317 + $0x30] sm:%s309] %v342
                  %v344 = vld [vmem:[%s316 + $0x68] sm:%s309]
                  %345 = vst [vmem:[%s317 + $0x34] sm:%s309] %v344
                  %v346 = vld [vmem:[%s316 + $0x70] sm:%s309]
                  %347 = vst [vmem:[%s317 + $0x38] sm:%s309] %v346
                  %v348 = vld [vmem:[%s316 + $0x78] sm:%s309]
                  %349 = vst [vmem:[%s317 + $0x3c] sm:%s309] %v348
                  %v350 = vld [vmem:[%s316 + $0x80] sm:%s309]
                  %351 = vst [vmem:[%s317 + $0x40] sm:%s309] %v350
                  %v352 = vld [vmem:[%s316 + $0x88] sm:%s309]
                  %353 = vst [vmem:[%s317 + $0x44] sm:%s309] %v352
                  %v354 = vld [vmem:[%s316 + $0x90] sm:%s309]
                  %355 = vst [vmem:[%s317 + $0x48] sm:%s309] %v354
                  %v356 = vld [vmem:[%s316 + $0x98] sm:%s309]
                  %357 = vst [vmem:[%s317 + $0x4c] sm:%s309] %v356
                  %v358 = vld [vmem:[%s316 + $0xa0] sm:%s309]
                  %359 = vst [vmem:[%s317 + $0x50] sm:%s309] %v358
                  %v360 = vld [vmem:[%s316 + $0xa8] sm:%s309]
                  %361 = vst [vmem:[%s317 + $0x54] sm:%s309] %v360
                  %v362 = vld [vmem:[%s316 + $0xb0] sm:%s309]
                  %363 = vst [vmem:[%s317 + $0x58] sm:%s309] %v362
                  %v364 = vld [vmem:[%s316 + $0xb8] sm:%s309]
                  %365 = vst [vmem:[%s317 + $0x5c] sm:%s309] %v364
                  %v366 = vld [vmem:[%s316 + $0xc0] sm:%s309]
                  %367 = vst [vmem:[%s317 + $0x60] sm:%s309] %v366
                  %v368 = vld [vmem:[%s316 + $0xc8] sm:%s309]
                  %369 = vst [vmem:[%s317 + $0x64] sm:%s309] %v368
                  %v370 = vld [vmem:[%s316 + $0xd0] sm:%s309]
                  %371 = vst [vmem:[%s317 + $0x68] sm:%s309] %v370
                  %v372 = vld [vmem:[%s316 + $0xd8] sm:%s309]
                  %373 = vst [vmem:[%s317 + $0x6c] sm:%s309] %v372
                  %v374 = vld [vmem:[%s316 + $0xe0] sm:%s309]
                  %375 = vst [vmem:[%s317 + $0x70] sm:%s309] %v374
                  %v376 = vld [vmem:[%s316 + $0xe8] sm:%s309]
                  %377 = vst [vmem:[%s317 + $0x74] sm:%s309] %v376
                  %v378 = vld [vmem:[%s316 + $0xf0] sm:%s309]
                  %379 = vst [vmem:[%s317 + $0x78] sm:%s309] %v378
                  %v380 = vld [vmem:[%s316 + $0xf8] sm:%s309]
                  %381 = vst [vmem:[%s317 + $0x7c] sm:%s309] %v380
                $region63: #{tpu_custom_call.1} parent=50 // loop_footer
                  %s315 = sadd.s32 1, %s311
                $region64: #{tpu_custom_call.1} parent=50 // loop_footer_branch
                  %310 = sbr.rel target = $region60
                $region65: #{tpu_custom_call.1} parent=50 // loop_exit
                  _
              $region51: #{tpu_custom_call.1} parent=35 // pred_fallthru
                _
            $region36: #{tpu_custom_call.1} parent=31 // pred_fallthru
              _
            // Predicated region
            $region37: #{tpu_custom_call.1} parent=31 // pred_check
              _
            $region38: #{tpu_custom_call.1} parent=31 // pred_check_branch
              %223 = sbr.rel (0) target = $region40
            $region39: #{tpu_custom_call.1} parent=31 // pred_region
              %s225 = ssub.s32 16, 1
              loop: start=0, step=1, limit=1
              $region41: #{tpu_custom_call.1} parent=39 // loop_pre_header
                _
              $region42: #{tpu_custom_call.1} parent=39 // loop_header
                %s227 = sphi 0, %s231
                %p228 = scmp.ge.s32.totalorder %s227, 1
                %s232 = sphi %s217, %s217
                %s233 = sphi %s215, %s215
              $region43: #{tpu_custom_call.1} parent=39 // loop_header_branch
                %230 = sbr.rel (%p228) target = $region47
              $region44: #{tpu_custom_call.1} parent=39 // loop_body
                %v234 = vld [vmem:[%s232] sm:%s225]
                %235 = vst [vmem:[%s233] sm:%s225] %v234
                %v236 = vld [vmem:[%s232 + $0x8] sm:%s225]
                %237 = vst [vmem:[%s233 + $0x4] sm:%s225] %v236
                %v238 = vld [vmem:[%s232 + $0x10] sm:%s225]
                %239 = vst [vmem:[%s233 + $0x8] sm:%s225] %v238
                %v240 = vld [vmem:[%s232 + $0x18] sm:%s225]
                %241 = vst [vmem:[%s233 + $0xc] sm:%s225] %v240
                %v242 = vld [vmem:[%s232 + $0x20] sm:%s225]
                %243 = vst [vmem:[%s233 + $0x10] sm:%s225] %v242
                %v244 = vld [vmem:[%s232 + $0x28] sm:%s225]
                %245 = vst [vmem:[%s233 + $0x14] sm:%s225] %v244
                %v246 = vld [vmem:[%s232 + $0x30] sm:%s225]
                %247 = vst [vmem:[%s233 + $0x18] sm:%s225] %v246
                %v248 = vld [vmem:[%s232 + $0x38] sm:%s225]
                %249 = vst [vmem:[%s233 + $0x1c] sm:%s225] %v248
                %v250 = vld [vmem:[%s232 + $0x40] sm:%s225]
                %251 = vst [vmem:[%s233 + $0x20] sm:%s225] %v250
                %v252 = vld [vmem:[%s232 + $0x48] sm:%s225]
                %253 = vst [vmem:[%s233 + $0x24] sm:%s225] %v252
                %v254 = vld [vmem:[%s232 + $0x50] sm:%s225]
                %255 = vst [vmem:[%s233 + $0x28] sm:%s225] %v254
                %v256 = vld [vmem:[%s232 + $0x58] sm:%s225]
                %257 = vst [vmem:[%s233 + $0x2c] sm:%s225] %v256
                %v258 = vld [vmem:[%s232 + $0x60] sm:%s225]
                %259 = vst [vmem:[%s233 + $0x30] sm:%s225] %v258
                %v260 = vld [vmem:[%s232 + $0x68] sm:%s225]
                %261 = vst [vmem:[%s233 + $0x34] sm:%s225] %v260
                %v262 = vld [vmem:[%s232 + $0x70] sm:%s225]
                %263 = vst [vmem:[%s233 + $0x38] sm:%s225] %v262
                %v264 = vld [vmem:[%s232 + $0x78] sm:%s225]
                %265 = vst [vmem:[%s233 + $0x3c] sm:%s225] %v264
                %v266 = vld [vmem:[%s232 + $0x80] sm:%s225]
                %267 = vst [vmem:[%s233 + $0x40] sm:%s225] %v266
                %v268 = vld [vmem:[%s232 + $0x88] sm:%s225]
                %269 = vst [vmem:[%s233 + $0x44] sm:%s225] %v268
                %v270 = vld [vmem:[%s232 + $0x90] sm:%s225]
                %271 = vst [vmem:[%s233 + $0x48] sm:%s225] %v270
                %v272 = vld [vmem:[%s232 + $0x98] sm:%s225]
                %273 = vst [vmem:[%s233 + $0x4c] sm:%s225] %v272
                %v274 = vld [vmem:[%s232 + $0xa0] sm:%s225]
                %275 = vst [vmem:[%s233 + $0x50] sm:%s225] %v274
                %v276 = vld [vmem:[%s232 + $0xa8] sm:%s225]
                %277 = vst [vmem:[%s233 + $0x54] sm:%s225] %v276
                %v278 = vld [vmem:[%s232 + $0xb0] sm:%s225]
                %279 = vst [vmem:[%s233 + $0x58] sm:%s225] %v278
                %v280 = vld [vmem:[%s232 + $0xb8] sm:%s225]
                %281 = vst [vmem:[%s233 + $0x5c] sm:%s225] %v280
                %v282 = vld [vmem:[%s232 + $0xc0] sm:%s225]
                %283 = vst [vmem:[%s233 + $0x60] sm:%s225] %v282
                %v284 = vld [vmem:[%s232 + $0xc8] sm:%s225]
                %285 = vst [vmem:[%s233 + $0x64] sm:%s225] %v284
                %v286 = vld [vmem:[%s232 + $0xd0] sm:%s225]
                %287 = vst [vmem:[%s233 + $0x68] sm:%s225] %v286
                %v288 = vld [vmem:[%s232 + $0xd8] sm:%s225]
                %289 = vst [vmem:[%s233 + $0x6c] sm:%s225] %v288
                %v290 = vld [vmem:[%s232 + $0xe0] sm:%s225]
                %291 = vst [vmem:[%s233 + $0x70] sm:%s225] %v290
                %v292 = vld [vmem:[%s232 + $0xe8] sm:%s225]
                %293 = vst [vmem:[%s233 + $0x74] sm:%s225] %v292
                %v294 = vld [vmem:[%s232 + $0xf0] sm:%s225]
                %295 = vst [vmem:[%s233 + $0x78] sm:%s225] %v294
                %v296 = vld [vmem:[%s232 + $0xf8] sm:%s225]
                %297 = vst [vmem:[%s233 + $0x7c] sm:%s225] %v296
              $region45: #{tpu_custom_call.1} parent=39 // loop_footer
                %s231 = sadd.s32 1, %s227
              $region46: #{tpu_custom_call.1} parent=39 // loop_footer_branch
                %226 = sbr.rel target = $region42
              $region47: #{tpu_custom_call.1} parent=39 // loop_exit
                _
            $region40: #{tpu_custom_call.1} parent=31 // pred_fallthru
              _
          $region32: #{tpu_custom_call.1} parent=27 // pred_fallthru
            _
          %382 = vnop
        $region28: #{tpu_custom_call.1} parent=15 // pred_fallthru
          _
        // Predicated region
        $region66: #{tpu_custom_call.1} parent=15 // pred_check
          %p383 = pneg %p126
        $region67: #{tpu_custom_call.1} parent=15 // pred_check_branch
          %385 = sbr.rel (%p383) target = $region69
        $region68: #{tpu_custom_call.1} parent=15 // pred_region
          %p386 = scmp.lt.s32.totalorder %s24, 1
          %s387 = scalar_select %p386, %s24, 1
          %s388 = scalar_lea.vmem %s3, %s387
        $region69: #{tpu_custom_call.1} parent=15 // pred_fallthru
          _
      $region16: #{tpu_custom_call.1} parent=5 // pred_fallthru
        _
      %p389 = scmp.le.s32.totalorder 1, %s16
      %p390 = scmp.lt.s32.totalorder %s16, 5
      %p391 = pnand %p389, %p390
      %p392 = pneg %p391
      // Predicated region
      $region70: #{tpu_custom_call.1} parent=5 // pred_check
        _
      $region71: #{tpu_custom_call.1} parent=5 // pred_check_branch
        %394 = sbr.rel (%p391) target = $region73
      $region72: #{tpu_custom_call.1} parent=5 // pred_region
        %s395 = ssub.s32 %s16, 1
        %s396 = sand.u32 %s41, 1
        %s397 = scalar_lea.sflag [#allocation3], %s396
        %s398 = sand.u32 %s41, 1
        %s399 = smul.addr %s398, 256
        %s400 = scalar_lea.vmem [#allocation2], %s399
        // Predicated region
        $region74: #{tpu_custom_call.1} parent=72 // pred_check
          %p401 = pneg %p54
        $region75: #{tpu_custom_call.1} parent=72 // pred_check_branch
          %403 = sbr.rel (%p401) target = $region77
        $region76: #{tpu_custom_call.1} parent=72 // pred_region
          %405 = dma.done %s397, 4096
        $region77: #{tpu_custom_call.1} parent=72 // pred_fallthru
          _
        %s406 = sand.u32 %s93, 1
        %s407 = sand.u32 %s93, 1
        %s408 = smul.addr %s407, 128
        %s409 = scalar_lea.vmem [#allocation5], %s408
        // Predicated region
        $region78: #{tpu_custom_call.1} parent=72 // pred_check
          %p410 = pneg %p106
        $region79: #{tpu_custom_call.1} parent=72 // pred_check_branch
          %412 = sbr.rel (%p410) target = $region81
        $region80: #{tpu_custom_call.1} parent=72 // pred_region
          _
        $region81: #{tpu_custom_call.1} parent=72 // pred_fallthru
          _
        %s413 = sand.u32 %s41, 1
        %s414 = scalar_lea.sflag [#allocation3], %s413
        %s415 = sand.u32 %s41, 1
        %s416 = smul.addr %s415, 256
        %s417 = scalar_lea.vmem [#allocation2], %s416
        %p418 = pneg %p54
        %p419 = pneg %p51
        %p420 = scmp.lt.s32.totalorder %s25, 1
        %s421 = scalar_select %p420, %s25, 1
        %s422 = smul.addr %s421, 16
        %s423 = smul.addr %s422, 8
        %s424 = scalar_lea.vmem %s1, %s423
        %p425 = pneg %p80
        %p426 = pneg %p77
        %s427 = sand.u32 %s93, 1
        %s428 = sand.u32 %s93, 1
        %s429 = smul.addr %s428, 128
        %s430 = scalar_lea.vmem [#allocation5], %s429
        %p431 = pneg %p106
        %p432 = pneg %p103
        %p433 = scmp.lt.s32.totalorder %s26, 1
        %s434 = scalar_select %p433, %s26, 1
        %s435 = scalar_lea.vmem %s3, %s434
        %p436 = pneg %p132
        %p437 = pneg %p129
        %p438 = pneg %p160
        %p439 = pneg %p157
        %s440 = sand.u32 %s147, 1
        %s441 = scalar_lea.sflag [#allocation4], %s440
        %s442 = sand.u32 %s147, 1
        %s443 = smul.addr %s442, 128
        %s444 = scalar_lea.vmem [#allocation6], %s443
        %p445 = scmp.lt.s32.totalorder %s25, 1
        %s446 = scalar_select %p445, %s25, 1
        %s447 = smul.addr %s446, 16
        %s448 = smul.addr %s447, 8
        %s449 = scalar_lea.vmem %s1, %s448
        %p450 = scmp.lt.s32.totalorder %s26, 1
        %s451 = scalar_select %p450, %s26, 1
        %s452 = scalar_lea.vmem %s3, %s451
        %v453 = vld [vmem:[%s400] sm:$0xff]
        %v454 = vld [vmem:[%s400 + $0x8] sm:$0xff]
        %v455 = vld [vmem:[%s400 + $0x10] sm:$0xff]
        %v456 = vld [vmem:[%s400 + $0x18] sm:$0xff]
        %v457 = vld [vmem:[%s400 + $0x20] sm:$0xff]
        %v458 = vld [vmem:[%s400 + $0x28] sm:$0xff]
        %v459 = vld [vmem:[%s400 + $0x30] sm:$0xff]
        %v460 = vld [vmem:[%s400 + $0x38] sm:$0xff]
        %v461 = vld [vmem:[%s400 + $0x40] sm:$0xff]
        %v462 = vld [vmem:[%s400 + $0x48] sm:$0xff]
        %v463 = vld [vmem:[%s400 + $0x50] sm:$0xff]
        %v464 = vld [vmem:[%s400 + $0x58] sm:$0xff]
        %v465 = vld [vmem:[%s400 + $0x60] sm:$0xff]
        %v466 = vld [vmem:[%s400 + $0x68] sm:$0xff]
        %v467 = vld [vmem:[%s400 + $0x70] sm:$0xff]
        %v468 = vld [vmem:[%s400 + $0x78] sm:$0xff]
        %v469 = vld [vmem:[%s400 + $0x80] sm:$0xff]
        %v470 = vld [vmem:[%s400 + $0x88] sm:$0xff]
        %v471 = vld [vmem:[%s400 + $0x90] sm:$0xff]
        %v472 = vld [vmem:[%s400 + $0x98] sm:$0xff]
        %v473 = vld [vmem:[%s400 + $0xa0] sm:$0xff]
        %v474 = vld [vmem:[%s400 + $0xa8] sm:$0xff]
        %v475 = vld [vmem:[%s400 + $0xb0] sm:$0xff]
        %v476 = vld [vmem:[%s400 + $0xb8] sm:$0xff]
        %v477 = vld [vmem:[%s400 + $0xc0] sm:$0xff]
        %v478 = vld [vmem:[%s400 + $0xc8] sm:$0xff]
        %v479 = vld [vmem:[%s400 + $0xd0] sm:$0xff]
        %v480 = vld [vmem:[%s400 + $0xd8] sm:$0xff]
        %v481 = vld [vmem:[%s400 + $0xe0] sm:$0xff]
        %v482 = vld [vmem:[%s400 + $0xe8] sm:$0xff]
        %v483 = vld [vmem:[%s400 + $0xf0] sm:$0xff]
        %v484 = vld [vmem:[%s400 + $0xf8] sm:$0xff]
        %v485 = vld [vmem:[%s449] sm:$0xff]
        %v486 = vld [vmem:[%s449 + $0x8] sm:$0xff]
        %v487 = vld [vmem:[%s449 + $0x10] sm:$0xff]
        %v488 = vld [vmem:[%s449 + $0x18] sm:$0xff]
        %v489 = vld [vmem:[%s449 + $0x20] sm:$0xff]
        %v490 = vld [vmem:[%s449 + $0x28] sm:$0xff]
        %v491 = vld [vmem:[%s449 + $0x30] sm:$0xff]
        %v492 = vld [vmem:[%s449 + $0x38] sm:$0xff]
        %v493 = vld [vmem:[%s449 + $0x40] sm:$0xff]
        %v494 = vld [vmem:[%s449 + $0x48] sm:$0xff]
        %v495 = vld [vmem:[%s449 + $0x50] sm:$0xff]
        %v496 = vld [vmem:[%s449 + $0x58] sm:$0xff]
        %v497 = vld [vmem:[%s449 + $0x60] sm:$0xff]
        %v498 = vld [vmem:[%s449 + $0x68] sm:$0xff]
        %v499 = vld [vmem:[%s449 + $0x70] sm:$0xff]
        %v500 = vld [vmem:[%s449 + $0x78] sm:$0xff]
        %v501 = vlaneseq
        %v502 = vshrl.u32 %v501, 7
        %v503 = vadd.s32 %v502, 8
        %v504 = vadd.s32 %v502, 16
        %v505 = vadd.s32 %v502, 24
        %v506 = vadd.s32 %v502, 32
        %v507 = vadd.s32 %v502, 40
        %v508 = vadd.s32 %v502, 48
        %v509 = vadd.s32 %v502, 56
        %v510 = vadd.s32 %v502, 64
        %v511 = vadd.s32 %v502, 72
        %v512 = vadd.s32 %v502, 80
        %v513 = vadd.s32 %v502, 88
        %v514 = vadd.s32 %v502, 96
        %v515 = vadd.s32 %v502, 104
        %v516 = vadd.s32 %v502, 112
        %v517 = vadd.s32 %v502, 120
        %v518 = vlaneseq
        %v519 = vand.u32 %v518, 127
        %v520 = vadd.s32 %v519, 128
        %522 = vset.pattern.permute.xlu0 0
        %523 = vperm.xlu0 %522, %v485
        %v524 = vpop.permute.xlu0 %523
        %527 = vset.pattern.permute.xlu0 0
        %528 = vperm.xlu0 %527, %v486
        %v529 = vpop.permute.xlu0 %528
        %532 = vset.pattern.permute.xlu0 0
        %533 = vperm.xlu0 %532, %v487
        %v534 = vpop.permute.xlu0 %533
        %537 = vset.pattern.permute.xlu0 0
        %538 = vperm.xlu0 %537, %v488
        %v539 = vpop.permute.xlu0 %538
        %542 = vset.pattern.permute.xlu0 0
        %543 = vperm.xlu0 %542, %v489
        %v544 = vpop.permute.xlu0 %543
        %547 = vset.pattern.permute.xlu0 0
        %548 = vperm.xlu0 %547, %v490
        %v549 = vpop.permute.xlu0 %548
        %552 = vset.pattern.permute.xlu0 0
        %553 = vperm.xlu0 %552, %v491
        %v554 = vpop.permute.xlu0 %553
        %557 = vset.pattern.permute.xlu0 0
        %558 = vperm.xlu0 %557, %v492
        %v559 = vpop.permute.xlu0 %558
        %562 = vset.pattern.permute.xlu0 0
        %563 = vperm.xlu0 %562, %v493
        %v564 = vpop.permute.xlu0 %563
        %567 = vset.pattern.permute.xlu0 0
        %568 = vperm.xlu0 %567, %v494
        %v569 = vpop.permute.xlu0 %568
        %572 = vset.pattern.permute.xlu0 0
        %573 = vperm.xlu0 %572, %v495
        %v574 = vpop.permute.xlu0 %573
        %577 = vset.pattern.permute.xlu0 0
        %578 = vperm.xlu0 %577, %v496
        %v579 = vpop.permute.xlu0 %578
        %582 = vset.pattern.permute.xlu0 0
        %583 = vperm.xlu0 %582, %v497
        %v584 = vpop.permute.xlu0 %583
        %587 = vset.pattern.permute.xlu0 0
        %588 = vperm.xlu0 %587, %v498
        %v589 = vpop.permute.xlu0 %588
        %592 = vset.pattern.permute.xlu0 0
        %593 = vperm.xlu0 %592, %v499
        %v594 = vpop.permute.xlu0 %593
        %597 = vset.pattern.permute.xlu0 0
        %598 = vperm.xlu0 %597, %v500
        %v599 = vpop.permute.xlu0 %598
        %v601 = vmul.f32 %v453, %v524
        %v602 = vmul.f32 %v454, %v524
        %v603 = vmul.f32 %v455, %v529
        %v604 = vmul.f32 %v456, %v529
        %v605 = vmul.f32 %v457, %v534
        %v606 = vmul.f32 %v458, %v534
        %v607 = vmul.f32 %v459, %v539
        %v608 = vmul.f32 %v460, %v539
        %v609 = vmul.f32 %v461, %v544
        %v610 = vmul.f32 %v462, %v544
        %v611 = vmul.f32 %v463, %v549
        %v612 = vmul.f32 %v464, %v549
        %v613 = vmul.f32 %v465, %v554
        %v614 = vmul.f32 %v466, %v554
        %v615 = vmul.f32 %v467, %v559
        %v616 = vmul.f32 %v468, %v559
        %v617 = vmul.f32 %v469, %v564
        %v618 = vmul.f32 %v470, %v564
        %v619 = vmul.f32 %v471, %v569
        %v620 = vmul.f32 %v472, %v569
        %v621 = vmul.f32 %v473, %v574
        %v622 = vmul.f32 %v474, %v574
        %v623 = vmul.f32 %v475, %v579
        %v624 = vmul.f32 %v476, %v579
        %v625 = vmul.f32 %v477, %v584
        %v626 = vmul.f32 %v478, %v584
        %v627 = vmul.f32 %v479, %v589
        %v628 = vmul.f32 %v480, %v589
        %v629 = vmul.f32 %v481, %v594
        %v630 = vmul.f32 %v482, %v594
        %v631 = vmul.f32 %v483, %v599
        %v632 = vmul.f32 %v484, %v599
        %v633 = vrot.slane %v601, 7
        %v634 = vrot.slane %v602, 7
        %v635 = vrot.slane %v603, 7
        %v636 = vrot.slane %v604, 7
        %v637 = vrot.slane %v605, 7
        %v638 = vrot.slane %v606, 7
        %v639 = vrot.slane %v607, 7
        %v640 = vrot.slane %v608, 7
        %v641 = vrot.slane %v609, 7
        %v642 = vrot.slane %v610, 7
        %v643 = vrot.slane %v611, 7
        %v644 = vrot.slane %v612, 7
        %v645 = vrot.slane %v613, 7
        %v646 = vrot.slane %v614, 7
        %v647 = vrot.slane %v615, 7
        %v648 = vrot.slane %v616, 7
        %v649 = vrot.slane %v617, 7
        %v650 = vrot.slane %v618, 7
        %v651 = vrot.slane %v619, 7
        %v652 = vrot.slane %v620, 7
        %v653 = vrot.slane %v621, 7
        %v654 = vrot.slane %v622, 7
        %v655 = vrot.slane %v623, 7
        %v656 = vrot.slane %v624, 7
        %v657 = vrot.slane %v625, 7
        %v658 = vrot.slane %v626, 7
        %v659 = vrot.slane %v627, 7
        %v660 = vrot.slane %v628, 7
        %v661 = vrot.slane %v629, 7
        %v662 = vrot.slane %v630, 7
        %v663 = vrot.slane %v631, 7
        %v664 = vrot.slane %v632, 7
        %vm665 = vcmp.lt.s32.totalorder %v502, 1
        %v666 = vsel %vm665, %v661, %v663
        %v667 = vsel %vm665, %v662, %v664
        %v668 = vsel %vm665, %v659, %v661
        %v669 = vsel %vm665, %v660, %v662
        %v670 = vsel %vm665, %v657, %v659
        %v671 = vsel %vm665, %v658, %v660
        %v672 = vsel %vm665, %v655, %v657
        %v673 = vsel %vm665, %v656, %v658
        %v674 = vsel %vm665, %v653, %v655
        %v675 = vsel %vm665, %v654, %v656
        %v676 = vsel %vm665, %v651, %v653
        %v677 = vsel %vm665, %v652, %v654
        %v678 = vsel %vm665, %v649, %v651
        %v679 = vsel %vm665, %v650, %v652
        %v680 = vsel %vm665, %v647, %v649
        %v681 = vsel %vm665, %v648, %v650
        %v682 = vsel %vm665, %v645, %v647
        %v683 = vsel %vm665, %v646, %v648
        %v684 = vsel %vm665, %v643, %v645
        %v685 = vsel %vm665, %v644, %v646
        %v686 = vsel %vm665, %v641, %v643
        %v687 = vsel %vm665, %v642, %v644
        %v688 = vsel %vm665, %v639, %v641
        %v689 = vsel %vm665, %v640, %v642
        %v690 = vsel %vm665, %v637, %v639
        %v691 = vsel %vm665, %v638, %v640
        %v692 = vsel %vm665, %v635, %v637
        %v693 = vsel %vm665, %v636, %v638
        %v694 = vsel %vm665, %v633, %v635
        %v695 = vsel %vm665, %v634, %v636
        %v696 = vsel %vm665, %v663, %v633
        %v697 = vsel %vm665, %v664, %v634
        %vm698 = vcmp.ge.s32.totalorder %v502, 1
        %vm699 = vcmp.ge.s32.totalorder %v503, 1
        %vm700 = vcmp.ge.s32.totalorder %v504, 1
        %vm701 = vcmp.ge.s32.totalorder %v505, 1
        %vm702 = vcmp.ge.s32.totalorder %v506, 1
        %vm703 = vcmp.ge.s32.totalorder %v507, 1
        %vm704 = vcmp.ge.s32.totalorder %v508, 1
        %vm705 = vcmp.ge.s32.totalorder %v509, 1
        %vm706 = vcmp.ge.s32.totalorder %v510, 1
        %vm707 = vcmp.ge.s32.totalorder %v511, 1
        %vm708 = vcmp.ge.s32.totalorder %v512, 1
        %vm709 = vcmp.ge.s32.totalorder %v513, 1
        %vm710 = vcmp.ge.s32.totalorder %v514, 1
        %vm711 = vcmp.ge.s32.totalorder %v515, 1
        %vm712 = vcmp.ge.s32.totalorder %v516, 1
        %vm713 = vcmp.ge.s32.totalorder %v517, 1
        %v714 = vsel %vm698, %v696, 0.0
        %v715 = vsel %vm698, %v697, 0.0
        %v716 = vsel %vm699, %v694, 0.0
        %v717 = vsel %vm699, %v695, 0.0
        %v718 = vsel %vm700, %v692, 0.0
        %v719 = vsel %vm700, %v693, 0.0
        %v720 = vsel %vm701, %v690, 0.0
        %v721 = vsel %vm701, %v691, 0.0
        %v722 = vsel %vm702, %v688, 0.0
        %v723 = vsel %vm702, %v689, 0.0
        %v724 = vsel %vm703, %v686, 0.0
        %v725 = vsel %vm703, %v687, 0.0
        %v726 = vsel %vm704, %v684, 0.0
        %v727 = vsel %vm704, %v685, 0.0
        %v728 = vsel %vm705, %v682, 0.0
        %v729 = vsel %vm705, %v683, 0.0
        %v730 = vsel %vm706, %v680, 0.0
        %v731 = vsel %vm706, %v681, 0.0
        %v732 = vsel %vm707, %v678, 0.0
        %v733 = vsel %vm707, %v679, 0.0
        %v734 = vsel %vm708, %v676, 0.0
        %v735 = vsel %vm708, %v677, 0.0
        %v736 = vsel %vm709, %v674, 0.0
        %v737 = vsel %vm709, %v675, 0.0
        %v738 = vsel %vm710, %v672, 0.0
        %v739 = vsel %vm710, %v673, 0.0
        %v740 = vsel %vm711, %v670, 0.0
        %v741 = vsel %vm711, %v671, 0.0
        %v742 = vsel %vm712, %v668, 0.0
        %v743 = vsel %vm712, %v669, 0.0
        %v744 = vsel %vm713, %v666, 0.0
        %v745 = vsel %vm713, %v667, 0.0
        %vm746 = vcmp.ge.s32.totalorder %v519, 128
        %vm747 = vcmp.ge.s32.totalorder %v520, 128
        %vm748 = vcmp.lt.s32.totalorder %v519, 256
        %vm749 = vcmp.lt.s32.totalorder %v520, 256
        %vm750 = vmand %vm746, %vm748
        %vm751 = vmand %vm747, %vm749
        %v752 = vsel %vm750, %v714, %v453
        %v753 = vsel %vm751, %v715, %v454
        %v754 = vsel %vm750, %v716, %v455
        %v755 = vsel %vm751, %v717, %v456
        %v756 = vsel %vm750, %v718, %v457
        %v757 = vsel %vm751, %v719, %v458
        %v758 = vsel %vm750, %v720, %v459
        %v759 = vsel %vm751, %v721, %v460
        %v760 = vsel %vm750, %v722, %v461
        %v761 = vsel %vm751, %v723, %v462
        %v762 = vsel %vm750, %v724, %v463
        %v763 = vsel %vm751, %v725, %v464
        %v764 = vsel %vm750, %v726, %v465
        %v765 = vsel %vm751, %v727, %v466
        %v766 = vsel %vm750, %v728, %v467
        %v767 = vsel %vm751, %v729, %v468
        %v768 = vsel %vm750, %v730, %v469
        %v769 = vsel %vm751, %v731, %v470
        %v770 = vsel %vm750, %v732, %v471
        %v771 = vsel %vm751, %v733, %v472
        %v772 = vsel %vm750, %v734, %v473
        %v773 = vsel %vm751, %v735, %v474
        %v774 = vsel %vm750, %v736, %v475
        %v775 = vsel %vm751, %v737, %v476
        %v776 = vsel %vm750, %v738, %v477
        %v777 = vsel %vm751, %v739, %v478
        %v778 = vsel %vm750, %v740, %v479
        %v779 = vsel %vm751, %v741, %v480
        %v780 = vsel %vm750, %v742, %v481
        %v781 = vsel %vm751, %v743, %v482
        %v782 = vsel %vm750, %v744, %v483
        %v783 = vsel %vm751, %v745, %v484
        %v784 = vpack.c.bf16 %v754, %v752
        %v785 = vpack.c.bf16 %v755, %v753
        %v786 = vpack.c.bf16 %v758, %v756
        %v787 = vpack.c.bf16 %v759, %v757
        %v788 = vpack.c.bf16 %v762, %v760
        %v789 = vpack.c.bf16 %v763, %v761
        %v790 = vpack.c.bf16 %v766, %v764
        %v791 = vpack.c.bf16 %v767, %v765
        %v792 = vpack.c.bf16 %v770, %v768
        %v793 = vpack.c.bf16 %v771, %v769
        %v794 = vpack.c.bf16 %v774, %v772
        %v795 = vpack.c.bf16 %v775, %v773
        %v796 = vpack.c.bf16 %v778, %v776
        %v797 = vpack.c.bf16 %v779, %v777
        %v798 = vpack.c.bf16 %v782, %v780
        %v799 = vpack.c.bf16 %v783, %v781
        %v800 = vld [vmem:[%s409] sm:$0xf]
        %v801 = vld [vmem:[%s409 + $0x4] sm:$0xf]
        %v802 = vld [vmem:[%s409 + $0x8] sm:$0xf]
        %v803 = vld [vmem:[%s409 + $0xc] sm:$0xf]
        %v804 = vld [vmem:[%s409 + $0x10] sm:$0xf]
        %v805 = vld [vmem:[%s409 + $0x14] sm:$0xf]
        %v806 = vld [vmem:[%s409 + $0x18] sm:$0xf]
        %v807 = vld [vmem:[%s409 + $0x1c] sm:$0xf]
        %v808 = vld [vmem:[%s409 + $0x20] sm:$0xf]
        %v809 = vld [vmem:[%s409 + $0x24] sm:$0xf]
        %v810 = vld [vmem:[%s409 + $0x28] sm:$0xf]
        %v811 = vld [vmem:[%s409 + $0x2c] sm:$0xf]
        %v812 = vld [vmem:[%s409 + $0x30] sm:$0xf]
        %v813 = vld [vmem:[%s409 + $0x34] sm:$0xf]
        %v814 = vld [vmem:[%s409 + $0x38] sm:$0xf]
        %v815 = vld [vmem:[%s409 + $0x3c] sm:$0xf]
        %v816 = vld [vmem:[%s409 + $0x40] sm:$0xf]
        %v817 = vld [vmem:[%s409 + $0x44] sm:$0xf]
        %v818 = vld [vmem:[%s409 + $0x48] sm:$0xf]
        %v819 = vld [vmem:[%s409 + $0x4c] sm:$0xf]
        %v820 = vld [vmem:[%s409 + $0x50] sm:$0xf]
        %v821 = vld [vmem:[%s409 + $0x54] sm:$0xf]
        %v822 = vld [vmem:[%s409 + $0x58] sm:$0xf]
        %v823 = vld [vmem:[%s409 + $0x5c] sm:$0xf]
        %v824 = vld [vmem:[%s409 + $0x60] sm:$0xf]
        %v825 = vld [vmem:[%s409 + $0x64] sm:$0xf]
        %v826 = vld [vmem:[%s409 + $0x68] sm:$0xf]
        %v827 = vld [vmem:[%s409 + $0x6c] sm:$0xf]
        %v828 = vld [vmem:[%s409 + $0x70] sm:$0xf]
        %v829 = vld [vmem:[%s409 + $0x74] sm:$0xf]
        %v830 = vld [vmem:[%s409 + $0x78] sm:$0xf]
        %v831 = vld [vmem:[%s409 + $0x7c] sm:$0xf]
        %v832 = vld [vmem:[%s452] sm:$0x1]
        %v834 = vperm.slane %v832, 0
        %v868 = vunpack.c.l.b16 %v800
        %v869 = vunpack.c.l.b16 %v801
        %v870 = vunpack.c.l.b16 %v802
        %v871 = vunpack.c.l.b16 %v803
        %v872 = vunpack.c.l.b16 %v804
        %v873 = vunpack.c.l.b16 %v805
        %v874 = vunpack.c.l.b16 %v806
        %v875 = vunpack.c.l.b16 %v807
        %v876 = vunpack.c.l.b16 %v808
        %v877 = vunpack.c.l.b16 %v809
        %v878 = vunpack.c.l.b16 %v810
        %v879 = vunpack.c.l.b16 %v811
        %v880 = vunpack.c.l.b16 %v812
        %v881 = vunpack.c.l.b16 %v813
        %v882 = vunpack.c.l.b16 %v814
        %v883 = vunpack.c.l.b16 %v815
        %v884 = vunpack.c.l.b16 %v816
        %v885 = vunpack.c.l.b16 %v817
        %v886 = vunpack.c.l.b16 %v818
        %v887 = vunpack.c.l.b16 %v819
        %v888 = vunpack.c.l.b16 %v820
        %v889 = vunpack.c.l.b16 %v821
        %v890 = vunpack.c.l.b16 %v822
        %v891 = vunpack.c.l.b16 %v823
        %v892 = vunpack.c.l.b16 %v824
        %v893 = vunpack.c.l.b16 %v825
        %v894 = vunpack.c.l.b16 %v826
        %v895 = vunpack.c.l.b16 %v827
        %v896 = vunpack.c.l.b16 %v828
        %v897 = vunpack.c.l.b16 %v829
        %v898 = vunpack.c.l.b16 %v830
        %v899 = vunpack.c.l.b16 %v831
        %v900 = vpack.c.b16 %v869, %v868
        %v901 = vpack.c.b16 %v871, %v870
        %v902 = vpack.c.b16 %v873, %v872
        %v903 = vpack.c.b16 %v875, %v874
        %v904 = vpack.c.b16 %v877, %v876
        %v905 = vpack.c.b16 %v879, %v878
        %v906 = vpack.c.b16 %v881, %v880
        %v907 = vpack.c.b16 %v883, %v882
        %v908 = vpack.c.b16 %v885, %v884
        %v909 = vpack.c.b16 %v887, %v886
        %v910 = vpack.c.b16 %v889, %v888
        %v911 = vpack.c.b16 %v891, %v890
        %v912 = vpack.c.b16 %v893, %v892
        %v913 = vpack.c.b16 %v895, %v894
        %v914 = vpack.c.b16 %v897, %v896
        %v915 = vpack.c.b16 %v899, %v898
        %932 = vmatpush.bf16.msra.mxu0 %v907
        %933 = vmatpush.bf16.msra.mxu0 %v906
        %934 = vmatpush.bf16.msra.mxu0 %v905
        %935 = vmatpush.bf16.msra.mxu0 %v904
        %936 = vmatpush.bf16.msra.mxu0 %v903
        %937 = vmatpush.bf16.msra.mxu0 %v902
        %938 = vmatpush.bf16.msra.mxu0 %v901
        %939 = vmatpush.bf16.msra.mxu0 %v900
        %940 = vmatmul.bf16.gmra.mxu0 %v784
        %v941 = vpop.f32.mrf.mxu0
        %v942 = vadd.f32 %v834, %v941
        %v943 = vpop.f32.mrf.mxu0
        %v944 = vadd.f32 %v834, %v943
        %945 = vmatmul.bf16.gmra.mxu0 %v786
        %v946 = vpop.f32.mrf.mxu0
        %v947 = vadd.f32 %v834, %v946
        %v948 = vpop.f32.mrf.mxu0
        %v949 = vadd.f32 %v834, %v948
        %950 = vmatmul.bf16.gmra.mxu0 %v788
        %v951 = vpop.f32.mrf.mxu0
        %v952 = vadd.f32 %v834, %v951
        %v953 = vpop.f32.mrf.mxu0
        %v954 = vadd.f32 %v834, %v953
        %955 = vmatmul.bf16.gmra.mxu0 %v790
        %v956 = vpop.f32.mrf.mxu0
        %v957 = vadd.f32 %v834, %v956
        %v958 = vpop.f32.mrf.mxu0
        %v959 = vadd.f32 %v834, %v958
        %960 = vmatmul.bf16.gmra.mxu0 %v792
        %v961 = vpop.f32.mrf.mxu0
        %v962 = vadd.f32 %v834, %v961
        %v963 = vpop.f32.mrf.mxu0
        %v964 = vadd.f32 %v834, %v963
        %965 = vmatmul.bf16.gmra.mxu0 %v794
        %v966 = vpop.f32.mrf.mxu0
        %v967 = vadd.f32 %v834, %v966
        %v968 = vpop.f32.mrf.mxu0
        %v969 = vadd.f32 %v834, %v968
        %970 = vmatmul.bf16.gmra.mxu0 %v796
        %v971 = vpop.f32.mrf.mxu0
        %v972 = vadd.f32 %v834, %v971
        %v973 = vpop.f32.mrf.mxu0
        %v974 = vadd.f32 %v834, %v973
        %975 = vmatmul.bf16.gmra.mxu0 %v798
        %v976 = vpop.f32.mrf.mxu0
        %v977 = vadd.f32 %v834, %v976
        %v978 = vpop.f32.mrf.mxu0
        %v979 = vadd.f32 %v834, %v978
        %980 = vdwg.mxu0
        %981 = vmatpush.bf16.msra.mxu0 %v915
        %982 = vmatpush.bf16.msra.mxu0 %v914
        %983 = vmatpush.bf16.msra.mxu0 %v913
        %984 = vmatpush.bf16.msra.mxu0 %v912
        %985 = vmatpush.bf16.msra.mxu0 %v911
        %986 = vmatpush.bf16.msra.mxu0 %v910
        %987 = vmatpush.bf16.msra.mxu0 %v909
        %988 = vmatpush.bf16.msra.mxu0 %v908
        %989 = vmatmul.bf16.gmra.mxu0 %v785
        %v990 = vpop.f32.mrf.mxu0
        %v991 = vadd.f32 %v942, %v990
        %v992 = vpop.f32.mrf.mxu0
        %v993 = vadd.f32 %v944, %v992
        %994 = vmatmul.bf16.gmra.mxu0 %v787
        %v995 = vpop.f32.mrf.mxu0
        %v996 = vadd.f32 %v947, %v995
        %v997 = vpop.f32.mrf.mxu0
        %v998 = vadd.f32 %v949, %v997
        %999 = vmatmul.bf16.gmra.mxu0 %v789
        %v1000 = vpop.f32.mrf.mxu0
        %v1001 = vadd.f32 %v952, %v1000
        %v1002 = vpop.f32.mrf.mxu0
        %v1003 = vadd.f32 %v954, %v1002
        %1004 = vmatmul.bf16.gmra.mxu0 %v791
        %v1005 = vpop.f32.mrf.mxu0
        %v1006 = vadd.f32 %v957, %v1005
        %v1007 = vpop.f32.mrf.mxu0
        %v1008 = vadd.f32 %v959, %v1007
        %1009 = vmatmul.bf16.gmra.mxu0 %v793
        %v1010 = vpop.f32.mrf.mxu0
        %v1011 = vadd.f32 %v962, %v1010
        %v1012 = vpop.f32.mrf.mxu0
        %v1013 = vadd.f32 %v964, %v1012
        %1014 = vmatmul.bf16.gmra.mxu0 %v795
        %v1015 = vpop.f32.mrf.mxu0
        %v1016 = vadd.f32 %v967, %v1015
        %v1017 = vpop.f32.mrf.mxu0
        %v1018 = vadd.f32 %v969, %v1017
        %1019 = vmatmul.bf16.gmra.mxu0 %v797
        %v1020 = vpop.f32.mrf.mxu0
        %v1021 = vadd.f32 %v972, %v1020
        %v1022 = vpop.f32.mrf.mxu0
        %v1023 = vadd.f32 %v974, %v1022
        %1024 = vmatmul.bf16.gmra.mxu0 %v799
        %v1025 = vpop.f32.mrf.mxu0
        %v1026 = vadd.f32 %v977, %v1025
        %v1027 = vpop.f32.mrf.mxu0
        %v1028 = vadd.f32 %v979, %v1027
        %1029 = vdwg.mxu0
        %1030 = vst [vmem:[%s444] sm:$0xff] %v991
        %1031 = vst [vmem:[%s444 + $0x8] sm:$0xff] %v993
        %1032 = vst [vmem:[%s444 + $0x10] sm:$0xff] %v996
        %1033 = vst [vmem:[%s444 + $0x18] sm:$0xff] %v998
        %1034 = vst [vmem:[%s444 + $0x20] sm:$0xff] %v1001
        %1035 = vst [vmem:[%s444 + $0x28] sm:$0xff] %v1003
        %1036 = vst [vmem:[%s444 + $0x30] sm:$0xff] %v1006
        %1037 = vst [vmem:[%s444 + $0x38] sm:$0xff] %v1008
        %1038 = vst [vmem:[%s444 + $0x40] sm:$0xff] %v1011
        %1039 = vst [vmem:[%s444 + $0x48] sm:$0xff] %v1013
        %1040 = vst [vmem:[%s444 + $0x50] sm:$0xff] %v1016
        %1041 = vst [vmem:[%s444 + $0x58] sm:$0xff] %v1018
        %1042 = vst [vmem:[%s444 + $0x60] sm:$0xff] %v1021
        %1043 = vst [vmem:[%s444 + $0x68] sm:$0xff] %v1023
        %1044 = vst [vmem:[%s444 + $0x70] sm:$0xff] %v1026
        %1045 = vst [vmem:[%s444 + $0x78] sm:$0xff] %v1028
        %s1046 = sand.u32 %s147, 1
        %s1047 = scalar_lea.sflag [#allocation4], %s1046
        %s1048 = sand.u32 %s147, 1
        %s1049 = smul.addr %s1048, 128
        %s1050 = scalar_lea.vmem [#allocation6], %s1049
        // Predicated region
        $region82: #{tpu_custom_call.1} parent=72 // pred_check
          %p1051 = pneg %p157
        $region83: #{tpu_custom_call.1} parent=72 // pred_check_branch
          %1053 = sbr.rel (%p1051) target = $region85
        $region84: #{tpu_custom_call.1} parent=72 // pred_region
          %1055 = vsyncadd %s1047, 0
          %s1056 = smul.addr %s25, 32
          %s1057 = sadd.s32 %s26, %s1056
          %s1058 = smul.addr %s1057, 8
          %s1059 = scalar_lea.hbm %s4, %s1058
          %s1060 = sshll.u32 %s1050, 4
          %s1061 = int_to_ptr.vmem [resolvable:$true] %s1060
          %s1062 = sshll.u32 %s1059, 4
          %s1063 = int_to_ptr.hbm [resolvable:$true] %s1062
          %1068 = dma.vmem_to_hbm [thread:$0]  %s1061, 2048, %s1063, %s1047, 128, 256, 8
        $region85: #{tpu_custom_call.1} parent=72 // pred_fallthru
          _
      $region73: #{tpu_custom_call.1} parent=5 // pred_fallthru
        _
      %p1069 = scmp.le.s32.totalorder 2, %s16
      // Predicated region
      $region86: #{tpu_custom_call.1} parent=5 // pred_check
        %p1070 = pneg %p1069
      $region87: #{tpu_custom_call.1} parent=5 // pred_check_branch
        %1072 = sbr.rel (%p1070) target = $region89
      $region88: #{tpu_custom_call.1} parent=5 // pred_region
        %s1073 = ssub.s32 %s16, 2
        // Predicated region
        $region90: #{tpu_custom_call.1} parent=88 // pred_check
          %p1074 = pneg %p163
        $region91: #{tpu_custom_call.1} parent=88 // pred_check_branch
          %1076 = sbr.rel (%p1074) target = $region93
        $region92: #{tpu_custom_call.1} parent=88 // pred_region
          %s1077 = sand.u32 %s148, 1
          %s1078 = scalar_lea.sflag [#allocation4], %s1077
          %s1079 = sand.u32 %s148, 1
          %s1080 = smul.addr %s1079, 128
          %s1081 = scalar_lea.vmem [#allocation6], %s1080
          %1083 = dma.done %s1078, 2048
        $region93: #{tpu_custom_call.1} parent=88 // pred_fallthru
          _
      $region89: #{tpu_custom_call.1} parent=5 // pred_fallthru
        _
    $region6: #{tpu_custom_call.1} parent=1 // loop_footer
      %s20 = sadd.s32 1, %s16
    $region7: #{tpu_custom_call.1} parent=1 // loop_footer_branch
      %15 = sbr.rel target = $region3
    $region8: #{tpu_custom_call.1} parent=1 // loop_exit
      _
    %1084 = vsyncpa [#allocation3], 1
    %s1085 = scalar_lea.sflag [#allocation3], 1
    %1086 = vsyncpa %s1085, 1
    %1087 = vsyncpa [#allocation4], 1
    %s1088 = scalar_lea.sflag [#allocation4], 1
    %1089 = vsyncpa %s1088, 1

</llo_original>
